<compile_context>
chip_gen: v7x
topology: tpu7x:2x2x1
jax: 0.10.0
libtpu: 0.0.40
codegen_flags: <defaults>
</compile_context>

<pallas_src>
import functools
import math

import jax
import jax.numpy as jnp
from jax import lax
from jax.experimental import pallas as pl
from jax.experimental.pallas import tpu as pltpu


def _round_up(x, m):
    return ((x + m - 1) // m) * m


_VMEM_LIMIT_BYTES = 48 * 1024 * 1024   # > default scoped limit everywhere, < v7x physical 64 MiB
_CHUNK_BUDGET_BYTES = 24 * 1024 * 1024  # budget for chunk-proportional buffers


def _pick_time_chunk(T, tb, h_pad, d_in):
    """Largest time-chunk whose chunk-proportional buffers fit the VMEM budget."""
    # per time step: bf16 input block x2 (double-buffered) + bf16 hseq output
    # block x2 + f32 projection scratch.
    per_step = tb * (4 * d_in + 4 * h_pad + 4 * h_pad)
    tc = int(max(8, min(128, _CHUNK_BUDGET_BYTES // max(per_step, 1))))
    return min(T, tc)


# --------------------------- per-layer pallas_call ----------------------------
@functools.lru_cache(maxsize=None)
def _make_rnn_layer(T, T_pad, tc, B_pad, tb, d_in, h_pad, fuse_fc, o_pad):
    """One tanh-RNN layer.  If fuse_fc, also applies the Linear head to h_{T-1}."""
    nb = B_pad // tb
    nchunks = T_pad // tc
    mask_tail = T != T_pad          # padded trailing time steps must not update h
    unroll = tc if tc <= 32 else 8  # partial unroll; full only for short chunks

    def project(x_ref, w_ih_ref, b_ref, proj_ref):
        # Hoisted input projection for the whole chunk: one MXU matmul.
        # Widen to f32 before the leading-dim collapse (layout-trivial for
        # 8-row sublane tiles), then pack to bf16 for the MXU; f32 accumulate.
        x2d = x_ref[...].astype(jnp.float32).reshape(tc * tb, d_in)
        proj_ref[...] = (
            jnp.dot(x2d.astype(jnp.bfloat16), w_ih_ref[...],
                    preferred_element_type=jnp.float32)
            + b_ref[...])

    def recurrence(c, proj_ref, w_hh, h0, hseq_ref):
        def step(t, h):
            row = pl.multiple_of(t * tb, tb)
            h_new = jnp.tanh(
                proj_ref[pl.ds(row, tb), :]
                + jnp.dot(h.astype(w_hh.dtype), w_hh,
                          preferred_element_type=jnp.float32))
            if mask_tail:
                h_new = jnp.where(c * tc + t < T, h_new, h)
            if hseq_ref is not None:
                hseq_ref[t] = h_new.astype(hseq_ref.dtype)
            return h_new
        return lax.fori_loop(0, tc, step, h0, unroll=unroll)

    if fuse_fc:
        def kernel(x_ref, w_ih_ref, w_hh_ref, b_ref, w_fc_ref, b_fc_ref,
                   out_ref, h_state, proj_ref):
            c = pl.program_id(1)

            @pl.when(c == 0)
            def _():
                h_state[...] = jnp.zeros_like(h_state)

            project(x_ref, w_ih_ref, b_ref, proj_ref)
            h_state[...] = recurrence(c, proj_ref, w_hh_ref[...],
                                      h_state[...], None)

            @pl.when(c == nchunks - 1)
            def _():
                w_fc = w_fc_ref[...]
                out_ref[...] = (
                    jnp.dot(h_state[...].astype(w_fc.dtype), w_fc,
                            preferred_element_type=jnp.float32)
                    + b_fc_ref[...]).astype(out_ref.dtype)

        in_specs = [
            pl.BlockSpec((tc, tb, d_in), lambda b, c: (c, b, 0)),
            pl.BlockSpec((d_in, h_pad), lambda b, c: (0, 0)),
            pl.BlockSpec((h_pad, h_pad), lambda b, c: (0, 0)),
            pl.BlockSpec((1, h_pad), lambda b, c: (0, 0)),
            pl.BlockSpec((h_pad, o_pad), lambda b, c: (0, 0)),
            pl.BlockSpec((1, o_pad), lambda b, c: (0, 0)),
        ]
        out_shape = jax.ShapeDtypeStruct((B_pad, o_pad), jnp.float32)
        out_specs = pl.BlockSpec((tb, o_pad), lambda b, c: (b, 0))
    else:
        def kernel(x_ref, w_ih_ref, w_hh_ref, b_ref, hseq_ref,
                   h_state, proj_ref):
            c = pl.program_id(1)

            @pl.when(c == 0)
            def _():
                h_state[...] = jnp.zeros_like(h_state)

            project(x_ref, w_ih_ref, b_ref, proj_ref)
            h_state[...] = recurrence(c, proj_ref, w_hh_ref[...],
                                      h_state[...], hseq_ref)

        in_specs = [
            pl.BlockSpec((tc, tb, d_in), lambda b, c: (c, b, 0)),
            pl.BlockSpec((d_in, h_pad), lambda b, c: (0, 0)),
            pl.BlockSpec((h_pad, h_pad), lambda b, c: (0, 0)),
            pl.BlockSpec((1, h_pad), lambda b, c: (0, 0)),
        ]
        out_shape = jax.ShapeDtypeStruct((T_pad, B_pad, h_pad), jnp.bfloat16)
        out_specs = pl.BlockSpec((tc, tb, h_pad), lambda b, c: (c, b, 0))

    return pl.pallas_call(
        kernel,
        out_shape=out_shape,
        grid_spec=pltpu.PrefetchScalarGridSpec(
            num_scalar_prefetch=0,
            grid=(nb, nchunks),                     # (batch blocks, time chunks)
            in_specs=in_specs,
            out_specs=out_specs,
            scratch_shapes=[
                pltpu.VMEM((tb, h_pad), jnp.float32),        # recurrent carry
                pltpu.VMEM((tc * tb, h_pad), jnp.float32),   # chunk input projection
            ],
        ),
        compiler_params=pltpu.CompilerParams(
            dimension_semantics=("parallel", "arbitrary"),
            vmem_limit_bytes=_VMEM_LIMIT_BYTES),
    )


# ------------------------------ parameter setup -------------------------------
def init_params(key, input_dim, hidden_dim, num_layers, output_dim):
    """Deterministic init mirroring nn.RNN / nn.Linear (weights pre-transposed for x @ W)."""
    params = {"layers": [], "hidden_dim": hidden_dim,
              "output_dim": output_dim, "input_dim": input_dim}
    bound = 1.0 / math.sqrt(hidden_dim)
    for layer in range(num_layers):
        d_in = input_dim if layer == 0 else hidden_dim
        key, k1, k2, k3, k4 = jax.random.split(key, 5)
        w_ih = jax.random.uniform(k1, (d_in, hidden_dim), jnp.float32, -bound, bound)
        w_hh = jax.random.uniform(k2, (hidden_dim, hidden_dim), jnp.float32, -bound, bound)
        b_ih = jax.random.uniform(k3, (hidden_dim,), jnp.float32, -bound, bound)
        b_hh = jax.random.uniform(k4, (hidden_dim,), jnp.float32, -bound, bound)
        # PyTorch adds b_ih + b_hh every step; fold them into one bias.
        params["layers"].append((w_ih, w_hh, (b_ih + b_hh)[None, :]))
    key, k1, k2 = jax.random.split(key, 3)
    fb = 1.0 / math.sqrt(hidden_dim)
    params["w_fc"] = jax.random.uniform(k1, (hidden_dim, output_dim), jnp.float32, -fb, fb)
    params["b_fc"] = jax.random.uniform(k2, (output_dim,), jnp.float32, -fb, fb)[None, :]
    return params


def pad_params(params):
    """Zero-pad H/O to multiples of 128; weights cast to bf16 (MXU), biases stay f32."""
    H = params["hidden_dim"]
    O = params["output_dim"]
    Din = params["input_dim"]
    H_pad = _round_up(H, 128)
    O_pad = _round_up(O, 128)
    padded = {"H_pad": H_pad, "O_pad": O_pad, "hidden_dim": H,
              "output_dim": O, "input_dim": Din, "layers": []}
    for i, (w_ih, w_hh, b) in enumerate(params["layers"]):
        d_in = w_ih.shape[0]
        d_in_pad = d_in if i == 0 else H_pad
        w_ih_p = (jnp.zeros((d_in_pad, H_pad), jnp.float32)
                  .at[:d_in, :H].set(w_ih).astype(jnp.bfloat16))
        w_hh_p = (jnp.zeros((H_pad, H_pad), jnp.float32)
                  .at[:H, :H].set(w_hh).astype(jnp.bfloat16))
        b_p = jnp.zeros((1, H_pad), jnp.float32).at[:, :H].set(b)
        padded["layers"].append((w_ih_p, w_hh_p, b_p))
    padded["w_fc"] = (jnp.zeros((H_pad, O_pad), jnp.float32)
                      .at[:H, :O].set(params["w_fc"]).astype(jnp.bfloat16))
    padded["b_fc"] = jnp.zeros((1, O_pad), jnp.float32).at[:, :O].set(params["b_fc"])
    return padded


# --------------------------------- forward -----------------------------------
def rnn_model_forward(padded_params, x_btd):
    """x_btd: (B, T, input_dim) batch-first, like the PyTorch module. -> (B, output_dim)."""
    B, T, Din = x_btd.shape
    H_pad = padded_params["H_pad"]
    O_pad = padded_params["O_pad"]
    O = padded_params["output_dim"]
    num_layers = len(padded_params["layers"])

    # --- batch tiling: >=2 tiles whenever possible so both v7x TCs are fed ---
    B_pad8 = _round_up(B, 8)
    if B_pad8 <= 8:
        tb = 8
    elif B_pad8 <= 256:
        tb = _round_up((B_pad8 + 1) // 2, 16)
    else:
        tb = 128
    nb = pl.cdiv(B_pad8, tb)
    B_pad = nb * tb

    # --- time chunking: VMEM stays O(chunk) regardless of T ---
    tc = _pick_time_chunk(T, tb, H_pad, max(Din, H_pad))
    T_pad = _round_up(T, tc)

    # bf16 activations in HBM (half the DMA bytes); time-major so each
    # recurrence step reads a contiguous (tb, H) tile.
    x = x_btd.astype(jnp.bfloat16)
    x = jnp.pad(x, ((0, B_pad - B), (0, T_pad - T), (0, 0)))
    cur = jnp.transpose(x, (1, 0, 2))                 # (T_pad, B_pad, Din)

    out_pad = None
    for layer in range(num_layers):
        w_ih, w_hh, b = padded_params["layers"][layer]
        d_in = cur.shape[-1]
        last = layer == num_layers - 1
        call = _make_rnn_layer(T, T_pad, tc, B_pad, tb, d_in, H_pad,
                               last, O_pad if last else None)
        if last:
            out_pad = call(cur, w_ih, w_hh, b,
                           padded_params["w_fc"], padded_params["b_fc"])
        else:
            # inter-layer hidden sequence spilled to HBM (bf16) and streamed
            # back per chunk by the next layer's pipeline.
            cur = call(cur, w_ih, w_hh, b)
    return out_pad[:B, :O]


# -------------------------- pure-JAX reference check --------------------------
def rnn_model_ref(params, x_btd):
    h = jnp.transpose(x_btd, (1, 0, 2)).astype(jnp.float32)
    for (w_ih, w_hh, b) in params["layers"]:
        B = h.shape[1]
        H = w_hh.shape[0]

        def step(h_prev, x_t, w_ih=w_ih, w_hh=w_hh, b=b):
            h_new = jnp.tanh(x_t @ w_ih + h_prev @ w_hh + b)
            return h_new, h_new

        _, hs = jax.lax.scan(step, jnp.zeros((B, H), jnp.float32), h)
        h = hs
    return h[-1] @ params["w_fc"] + params["b_fc"]


if __name__ == "__main__":
    # Small shapes consistent with the module's forward: x is (batch, seq, input_dim).
    batch, seq, input_dim = 2, 8, 4
    hidden_dim, num_layers, output_dim = 32, 2, 8

    key = jax.random.PRNGKey(0)
    key, kx = jax.random.split(key)
    x = jax.random.normal(kx, (batch, seq, input_dim), jnp.float32)

    params = init_params(key, input_dim, hidden_dim, num_layers, output_dim)
    padded = pad_params(params)

    out = rnn_model_forward(padded, x)
    out = jax.block_until_ready(out)

    ref = rnn_model_ref(params, x)
    assert out.shape == (batch, output_dim), out.shape
    # bf16 MXU matmuls with f32 accumulation -> relaxed tolerance vs f32 reference.
    assert jnp.allclose(out, ref, atol=5e-2, rtol=5e-2), (out, ref)

    print("KERNEL_OK")
</pallas_src>

<mosaic_0001>
module attributes {stable_mosaic.version = 11 : i64} {
  func.func @kernel(%arg0: i32, %arg1: i32, %arg2: memref<8x8x4xbf16, #tpu.memory_space<vmem>>, %arg3: memref<4x128xbf16, #tpu.memory_space<vmem>>, %arg4: memref<128x128xbf16, #tpu.memory_space<vmem>>, %arg5: memref<1x128xf32, #tpu.memory_space<vmem>>, %arg6: memref<8x8x128xbf16, #tpu.memory_space<vmem>>, %arg7: memref<8x128xf32, #tpu.memory_space<vmem>>, %arg8: memref<64x128xf32, #tpu.memory_space<vmem>>) attributes {dimension_semantics = [#tpu.dimension_semantics<parallel>, #tpu.dimension_semantics<arbitrary>], iteration_bounds = array<i64: 1, 1>, scalar_prefetch = 0 : i64, scratch_operands = 2 : i64, tpu.core_type = #tpu.core_type<tc>, window_params = [{transform_indices = @transform_0, window_bounds = array<i64: 8, 8, 4>}, {pipeline_mode = #tpu.pipeline_mode<synchronous>, transform_indices = @transform_1, window_bounds = array<i64: 4, 128>}, {pipeline_mode = #tpu.pipeline_mode<synchronous>, transform_indices = @transform_2, window_bounds = array<i64: 128, 128>}, {pipeline_mode = #tpu.pipeline_mode<synchronous>, transform_indices = @transform_3, window_bounds = array<i64: 1, 128>}, {transform_indices = @transform_4, window_bounds = array<i64: 8, 8, 128>}]} {
    %c0_i32 = arith.constant 0 : i32
    %0 = arith.cmpi eq, %arg1, %c0_i32 : i32
    %1 = arith.extui %0 : i1 to i32
    %c0_i32_0 = arith.constant 0 : i32
    %2 = arith.cmpi ne, %1, %c0_i32_0 : i32
    scf.if %2 {
      %cst_56 = arith.constant 0.000000e+00 : f32
      %120 = vector.broadcast %cst_56 : f32 to vector<8x128xf32>
      %c0_57 = arith.constant 0 : index
      %c0_58 = arith.constant 0 : index
      %121 = vector.load %arg7[%c0_57, %c0_58] : memref<8x128xf32, #tpu.memory_space<vmem>>, vector<8x128xf32>
      tpu.vector_store %arg7[%c0_57, %c0_58], %120 {strides = array<i32>} : memref<8x128xf32, #tpu.memory_space<vmem>>, vector<8x128xf32>,
    } else {
    }
    %c0 = arith.constant 0 : index
    %c0_1 = arith.constant 0 : index
    %c0_2 = arith.constant 0 : index
    %3 = vector.load %arg2[%c0, %c0_1, %c0_2] : memref<8x8x4xbf16, #tpu.memory_space<vmem>>, vector<8x8x4xbf16>
    %4 = arith.extf %3 : vector<8x8x4xbf16> to vector<8x8x4xf32>
    %5 = vector.shape_cast %4 : vector<8x8x4xf32> to vector<64x4xf32>
    %6 = arith.truncf %5 : vector<64x4xf32> to vector<64x4xbf16>
    %c0_3 = arith.constant 0 : index
    %c0_4 = arith.constant 0 : index
    %7 = vector.load %arg3[%c0_3, %c0_4] : memref<4x128xbf16, #tpu.memory_space<vmem>>, vector<4x128xbf16>
    %cst = arith.constant dense<0.000000e+00> : vector<64x128xf32>
    %8 = tpu.matmul %6, %7, %cst {dimension_numbers = #tpu.dot_dimension_numbers<[1], [0], [0], [1], [0, 0, 1, 1], [], []>} : vector<64x4xbf16>, vector<4x128xbf16>, vector<64x128xf32> -> vector<64x128xf32>
    %c0_5 = arith.constant 0 : index
    %c0_6 = arith.constant 0 : index
    %9 = vector.load %arg5[%c0_5, %c0_6] : memref<1x128xf32, #tpu.memory_space<vmem>>, vector<1x128xf32>
    %10 = vector.broadcast %9 : vector<1x128xf32> to vector<64x128xf32>
    %11 = arith.addf %8, %10 : vector<64x128xf32>
    %c0_7 = arith.constant 0 : index
    %c0_8 = arith.constant 0 : index
    %12 = vector.load %arg8[%c0_7, %c0_8] : memref<64x128xf32, #tpu.memory_space<vmem>>, vector<64x128xf32>
    tpu.vector_store %arg8[%c0_7, %c0_8], %11 {strides = array<i32>} : memref<64x128xf32, #tpu.memory_space<vmem>>, vector<64x128xf32>,
    %c0_9 = arith.constant 0 : index
    %c0_10 = arith.constant 0 : index
    %13 = vector.load %arg4[%c0_9, %c0_10] : memref<128x128xbf16, #tpu.memory_space<vmem>>, vector<128x128xbf16>
    %c0_11 = arith.constant 0 : index
    %c0_12 = arith.constant 0 : index
    %14 = vector.load %arg7[%c0_11, %c0_12] : memref<8x128xf32, #tpu.memory_space<vmem>>, vector<8x128xf32>
    %c0_i32_13 = arith.constant 0 : i32
    %c8_i32 = arith.constant 8 : i32
    %15 = arith.muli %c0_i32_13, %c8_i32 : i32
    %16 = tpu.assume_multiple %15, 8 : i32
    %17 = arith.index_cast %16 : i32 to index
    %c0_14 = arith.constant 0 : index
    %18 = vector.load %arg8[%17, %c0_14] : memref<64x128xf32, #tpu.memory_space<vmem>>, vector<8x128xf32>
    %19 = arith.truncf %14 : vector<8x128xf32> to vector<8x128xbf16>
    %cst_15 = arith.constant dense<0.000000e+00> : vector<8x128xf32>
    %20 = tpu.matmul %19, %13, %cst_15 {dimension_numbers = #tpu.dot_dimension_numbers<[1], [0], [0], [1], [0, 0, 1, 1], [], []>} : vector<8x128xbf16>, vector<128x128xbf16>, vector<8x128xf32> -> vector<8x128xf32>
    %21 = arith.addf %18, %20 : vector<8x128xf32>
    %22 = math.tanh %21 : vector<8x128xf32>
    %23 = arith.truncf %22 : vector<8x128xf32> to vector<8x128xbf16>
    %24 = arith.index_cast %c0_i32_13 : i32 to index
    %c0_16 = arith.constant 0 : index
    %c0_17 = arith.constant 0 : index
    %25 = vector.load %arg6[%24, %c0_16, %c0_17] : memref<8x8x128xbf16, #tpu.memory_space<vmem>>, vector<1x8x128xbf16>
    %26 = vector.shape_cast %25 : vector<1x8x128xbf16> to vector<8x128xbf16>
    %27 = vector.shape_cast %23 : vector<8x128xbf16> to vector<1x8x128xbf16>
    tpu.vector_store %arg6[%24, %c0_16, %c0_17], %27 {strides = array<i32>} : memref<8x8x128xbf16, #tpu.memory_space<vmem>>, vector<1x8x128xbf16>,
    %c1_i32 = arith.constant 1 : i32
    %c8_i32_18 = arith.constant 8 : i32
    %28 = arith.muli %c1_i32, %c8_i32_18 : i32
    %29 = tpu.assume_multiple %28, 8 : i32
    %30 = arith.index_cast %29 : i32 to index
    %c0_19 = arith.constant 0 : index
    %31 = vector.load %arg8[%30, %c0_19] : memref<64x128xf32, #tpu.memory_space<vmem>>, vector<8x128xf32>
    %32 = arith.truncf %22 : vector<8x128xf32> to vector<8x128xbf16>
    %cst_20 = arith.constant dense<0.000000e+00> : vector<8x128xf32>
    %33 = tpu.matmul %32, %13, %cst_20 {dimension_numbers = #tpu.dot_dimension_numbers<[1], [0], [0], [1], [0, 0, 1, 1], [], []>} : vector<8x128xbf16>, vector<128x128xbf16>, vector<8x128xf32> -> vector<8x128xf32>
    %34 = arith.addf %31, %33 : vector<8x128xf32>
    %35 = math.tanh %34 : vector<8x128xf32>
    %36 = arith.truncf %35 : vector<8x128xf32> to vector<8x128xbf16>
    %37 = arith.index_cast %c1_i32 : i32 to index
    %c0_21 = arith.constant 0 : index
    %c0_22 = arith.constant 0 : index
    %38 = vector.load %arg6[%37, %c0_21, %c0_22] : memref<8x8x128xbf16, #tpu.memory_space<vmem>>, vector<1x8x128xbf16>
    %39 = vector.shape_cast %38 : vector<1x8x128xbf16> to vector<8x128xbf16>
    %40 = vector.shape_cast %36 : vector<8x128xbf16> to vector<1x8x128xbf16>
    tpu.vector_store %arg6[%37, %c0_21, %c0_22], %40 {strides = array<i32>} : memref<8x8x128xbf16, #tpu.memory_space<vmem>>, vector<1x8x128xbf16>,
    %c2_i32 = arith.constant 2 : i32
    %c8_i32_23 = arith.constant 8 : i32
    %41 = arith.muli %c2_i32, %c8_i32_23 : i32
    %42 = tpu.assume_multiple %41, 8 : i32
    %43 = arith.index_cast %42 : i32 to index
    %c0_24 = arith.constant 0 : index
    %44 = vector.load %arg8[%43, %c0_24] : memref<64x128xf32, #tpu.memory_space<vmem>>, vector<8x128xf32>
    %45 = arith.truncf %35 : vector<8x128xf32> to vector<8x128xbf16>
    %cst_25 = arith.constant dense<0.000000e+00> : vector<8x128xf32>
    %46 = tpu.matmul %45, %13, %cst_25 {dimension_numbers = #tpu.dot_dimension_numbers<[1], [0], [0], [1], [0, 0, 1, 1], [], []>} : vector<8x128xbf16>, vector<128x128xbf16>, vector<8x128xf32> -> vector<8x128xf32>
    %47 = arith.addf %44, %46 : vector<8x128xf32>
    %48 = math.tanh %47 : vector<8x128xf32>
    %49 = arith.truncf %48 : vector<8x128xf32> to vector<8x128xbf16>
    %50 = arith.index_cast %c2_i32 : i32 to index
    %c0_26 = arith.constant 0 : index
    %c0_27 = arith.constant 0 : index
    %51 = vector.load %arg6[%50, %c0_26, %c0_27] : memref<8x8x128xbf16, #tpu.memory_space<vmem>>, vector<1x8x128xbf16>
    %52 = vector.shape_cast %51 : vector<1x8x128xbf16> to vector<8x128xbf16>
    %53 = vector.shape_cast %49 : vector<8x128xbf16> to vector<1x8x128xbf16>
    tpu.vector_store %arg6[%50, %c0_26, %c0_27], %53 {strides = array<i32>} : memref<8x8x128xbf16, #tpu.memory_space<vmem>>, vector<1x8x128xbf16>,
    %c3_i32 = arith.constant 3 : i32
    %c8_i32_28 = arith.constant 8 : i32
    %54 = arith.muli %c3_i32, %c8_i32_28 : i32
    %55 = tpu.assume_multiple %54, 8 : i32
    %56 = arith.index_cast %55 : i32 to index
    %c0_29 = arith.constant 0 : index
    %57 = vector.load %arg8[%56, %c0_29] : memref<64x128xf32, #tpu.memory_space<vmem>>, vector<8x128xf32>
    %58 = arith.truncf %48 : vector<8x128xf32> to vector<8x128xbf16>
    %cst_30 = arith.constant dense<0.000000e+00> : vector<8x128xf32>
    %59 = tpu.matmul %58, %13, %cst_30 {dimension_numbers = #tpu.dot_dimension_numbers<[1], [0], [0], [1], [0, 0, 1, 1], [], []>} : vector<8x128xbf16>, vector<128x128xbf16>, vector<8x128xf32> -> vector<8x128xf32>
    %60 = arith.addf %57, %59 : vector<8x128xf32>
    %61 = math.tanh %60 : vector<8x128xf32>
    %62 = arith.truncf %61 : vector<8x128xf32> to vector<8x128xbf16>
    %63 = arith.index_cast %c3_i32 : i32 to index
    %c0_31 = arith.constant 0 : index
    %c0_32 = arith.constant 0 : index
    %64 = vector.load %arg6[%63, %c0_31, %c0_32] : memref<8x8x128xbf16, #tpu.memory_space<vmem>>, vector<1x8x128xbf16>
    %65 = vector.shape_cast %64 : vector<1x8x128xbf16> to vector<8x128xbf16>
    %66 = vector.shape_cast %62 : vector<8x128xbf16> to vector<1x8x128xbf16>
    tpu.vector_store %arg6[%63, %c0_31, %c0_32], %66 {strides = array<i32>} : memref<8x8x128xbf16, #tpu.memory_space<vmem>>, vector<1x8x128xbf16>,
    %c4_i32 = arith.constant 4 : i32
    %c8_i32_33 = arith.constant 8 : i32
    %67 = arith.muli %c4_i32, %c8_i32_33 : i32
    %68 = tpu.assume_multiple %67, 8 : i32
    %69 = arith.index_cast %68 : i32 to index
    %c0_34 = arith.constant 0 : index
    %70 = vector.load %arg8[%69, %c0_34] : memref<64x128xf32, #tpu.memory_space<vmem>>, vector<8x128xf32>
    %71 = arith.truncf %61 : vector<8x128xf32> to vector<8x128xbf16>
    %cst_35 = arith.constant dense<0.000000e+00> : vector<8x128xf32>
    %72 = tpu.matmul %71, %13, %cst_35 {dimension_numbers = #tpu.dot_dimension_numbers<[1], [0], [0], [1], [0, 0, 1, 1], [], []>} : vector<8x128xbf16>, vector<128x128xbf16>, vector<8x128xf32> -> vector<8x128xf32>
    %73 = arith.addf %70, %72 : vector<8x128xf32>
    %74 = math.tanh %73 : vector<8x128xf32>
    %75 = arith.truncf %74 : vector<8x128xf32> to vector<8x128xbf16>
    %76 = arith.index_cast %c4_i32 : i32 to index
    %c0_36 = arith.constant 0 : index
    %c0_37 = arith.constant 0 : index
    %77 = vector.load %arg6[%76, %c0_36, %c0_37] : memref<8x8x128xbf16, #tpu.memory_space<vmem>>, vector<1x8x128xbf16>
    %78 = vector.shape_cast %77 : vector<1x8x128xbf16> to vector<8x128xbf16>
    %79 = vector.shape_cast %75 : vector<8x128xbf16> to vector<1x8x128xbf16>
    tpu.vector_store %arg6[%76, %c0_36, %c0_37], %79 {strides = array<i32>} : memref<8x8x128xbf16, #tpu.memory_space<vmem>>, vector<1x8x128xbf16>,
    %c5_i32 = arith.constant 5 : i32
    %c8_i32_38 = arith.constant 8 : i32
    %80 = arith.muli %c5_i32, %c8_i32_38 : i32
    %81 = tpu.assume_multiple %80, 8 : i32
    %82 = arith.index_cast %81 : i32 to index
    %c0_39 = arith.constant 0 : index
    %83 = vector.load %arg8[%82, %c0_39] : memref<64x128xf32, #tpu.memory_space<vmem>>, vector<8x128xf32>
    %84 = arith.truncf %74 : vector<8x128xf32> to vector<8x128xbf16>
    %cst_40 = arith.constant dense<0.000000e+00> : vector<8x128xf32>
    %85 = tpu.matmul %84, %13, %cst_40 {dimension_numbers = #tpu.dot_dimension_numbers<[1], [0], [0], [1], [0, 0, 1, 1], [], []>} : vector<8x128xbf16>, vector<128x128xbf16>, vector<8x128xf32> -> vector<8x128xf32>
    %86 = arith.addf %83, %85 : vector<8x128xf32>
    %87 = math.tanh %86 : vector<8x128xf32>
    %88 = arith.truncf %87 : vector<8x128xf32> to vector<8x128xbf16>
    %89 = arith.index_cast %c5_i32 : i32 to index
    %c0_41 = arith.constant 0 : index
    %c0_42 = arith.constant 0 : index
    %90 = vector.load %arg6[%89, %c0_41, %c0_42] : memref<8x8x128xbf16, #tpu.memory_space<vmem>>, vector<1x8x128xbf16>
    %91 = vector.shape_cast %90 : vector<1x8x128xbf16> to vector<8x128xbf16>
    %92 = vector.shape_cast %88 : vector<8x128xbf16> to vector<1x8x128xbf16>
    tpu.vector_store %arg6[%89, %c0_41, %c0_42], %92 {strides = array<i32>} : memref<8x8x128xbf16, #tpu.memory_space<vmem>>, vector<1x8x128xbf16>,
    %c6_i32 = arith.constant 6 : i32
    %c8_i32_43 = arith.constant 8 : i32
    %93 = arith.muli %c6_i32, %c8_i32_43 : i32
    %94 = tpu.assume_multiple %93, 8 : i32
    %95 = arith.index_cast %94 : i32 to index
    %c0_44 = arith.constant 0 : index
    %96 = vector.load %arg8[%95, %c0_44] : memref<64x128xf32, #tpu.memory_space<vmem>>, vector<8x128xf32>
    %97 = arith.truncf %87 : vector<8x128xf32> to vector<8x128xbf16>
    %cst_45 = arith.constant dense<0.000000e+00> : vector<8x128xf32>
    %98 = tpu.matmul %97, %13, %cst_45 {dimension_numbers = #tpu.dot_dimension_numbers<[1], [0], [0], [1], [0, 0, 1, 1], [], []>} : vector<8x128xbf16>, vector<128x128xbf16>, vector<8x128xf32> -> vector<8x128xf32>
    %99 = arith.addf %96, %98 : vector<8x128xf32>
    %100 = math.tanh %99 : vector<8x128xf32>
    %101 = arith.truncf %100 : vector<8x128xf32> to vector<8x128xbf16>
    %102 = arith.index_cast %c6_i32 : i32 to index
    %c0_46 = arith.constant 0 : index
    %c0_47 = arith.constant 0 : index
    %103 = vector.load %arg6[%102, %c0_46, %c0_47] : memref<8x8x128xbf16, #tpu.memory_space<vmem>>, vector<1x8x128xbf16>
    %104 = vector.shape_cast %103 : vector<1x8x128xbf16> to vector<8x128xbf16>
    %105 = vector.shape_cast %101 : vector<8x128xbf16> to vector<1x8x128xbf16>
    tpu.vector_store %arg6[%102, %c0_46, %c0_47], %105 {strides = array<i32>} : memref<8x8x128xbf16, #tpu.memory_space<vmem>>, vector<1x8x128xbf16>,
    %c7_i32 = arith.constant 7 : i32
    %c8_i32_48 = arith.constant 8 : i32
    %106 = arith.muli %c7_i32, %c8_i32_48 : i32
    %107 = tpu.assume_multiple %106, 8 : i32
    %108 = arith.index_cast %107 : i32 to index
    %c0_49 = arith.constant 0 : index
    %109 = vector.load %arg8[%108, %c0_49] : memref<64x128xf32, #tpu.memory_space<vmem>>, vector<8x128xf32>
    %110 = arith.truncf %100 : vector<8x128xf32> to vector<8x128xbf16>
    %cst_50 = arith.constant dense<0.000000e+00> : vector<8x128xf32>
    %111 = tpu.matmul %110, %13, %cst_50 {dimension_numbers = #tpu.dot_dimension_numbers<[1], [0], [0], [1], [0, 0, 1, 1], [], []>} : vector<8x128xbf16>, vector<128x128xbf16>, vector<8x128xf32> -> vector<8x128xf32>
    %112 = arith.addf %109, %111 : vector<8x128xf32>
    %113 = math.tanh %112 : vector<8x128xf32>
    %114 = arith.truncf %113 : vector<8x128xf32> to vector<8x128xbf16>
    %115 = arith.index_cast %c7_i32 : i32 to index
    %c0_51 = arith.constant 0 : index
    %c0_52 = arith.constant 0 : index
    %116 = vector.load %arg6[%115, %c0_51, %c0_52] : memref<8x8x128xbf16, #tpu.memory_space<vmem>>, vector<1x8x128xbf16>
    %117 = vector.shape_cast %116 : vector<1x8x128xbf16> to vector<8x128xbf16>
    %118 = vector.shape_cast %114 : vector<8x128xbf16> to vector<1x8x128xbf16>
    tpu.vector_store %arg6[%115, %c0_51, %c0_52], %118 {strides = array<i32>} : memref<8x8x128xbf16, #tpu.memory_space<vmem>>, vector<1x8x128xbf16>,
    %c8_i32_53 = arith.constant 8 : i32
    %c0_54 = arith.constant 0 : index
    %c0_55 = arith.constant 0 : index
    %119 = vector.load %arg7[%c0_54, %c0_55] : memref<8x128xf32, #tpu.memory_space<vmem>>, vector<8x128xf32>
    tpu.vector_store %arg7[%c0_54, %c0_55], %113 {strides = array<i32>} : memref<8x128xf32, #tpu.memory_space<vmem>>, vector<8x128xf32>,
    return
  }
  func.func @transform_0(%arg0: i32, %arg1: i32) -> (i32, i32, i32) {
    %c0_i32 = arith.constant 0 : i32
    %c0_i32_0 = arith.constant 0 : i32
    return %arg1, %arg0, %c0_i32 : i32, i32, i32
  }
  func.func @transform_1(%arg0: i32, %arg1: i32) -> (i32, i32) {
    %c0_i32 = arith.constant 0 : i32
    %c0_i32_0 = arith.constant 0 : i32
    %c0_i32_1 = arith.constant 0 : i32
    return %c0_i32, %c0_i32_0 : i32, i32
  }
  func.func @transform_2(%arg0: i32, %arg1: i32) -> (i32, i32) {
    %c0_i32 = arith.constant 0 : i32
    %c0_i32_0 = arith.constant 0 : i32
    %c0_i32_1 = arith.constant 0 : i32
    return %c0_i32, %c0_i32_0 : i32, i32
  }
  func.func @transform_3(%arg0: i32, %arg1: i32) -> (i32, i32) {
    %c0_i32 = arith.constant 0 : i32
    %c0_i32_0 = arith.constant 0 : i32
    %c0_i32_1 = arith.constant 0 : i32
    return %c0_i32, %c0_i32_0 : i32, i32
  }
  func.func @transform_4(%arg0: i32, %arg1: i32) -> (i32, i32, i32) {
    %c0_i32 = arith.constant 0 : i32
    %c0_i32_0 = arith.constant 0 : i32
    return %arg1, %arg0, %c0_i32 : i32, i32, i32
  }
}

</mosaic_0001>

<llo_original>
// kernel: tpu_custom_call.1
$region0: #{tpu_custom_call.1}
  #allocation0 [shape = 'u32[]', space=smem, size = 0x4, offset = 0x4, fixed_abs, tag = 'smem constant byte address 0x4 - core index']
  #allocation1 [shape = 'u32[144,128]{1,0:T(1,128)}', space=vmem, size = 0x12000, scoped, tag = 'internal scratch']
  #allocation2 [shape = 'f32[8,128]{1,0:T(8,128)}', space=vmem, size = 0x1000, scoped, tag = 'scratch operand']
  #allocation3 [shape = 'f32[64,128]{1,0:T(8,128)}', space=vmem, size = 0x8000, scoped, tag = 'scratch operand']
  %s0 = inlined_call_operand.vmem [shape: bf16[8,8,4], index: 0, kind: input, shape index: {}]
  %s1 = inlined_call_operand.vmem [shape: bf16[4,128], index: 1, kind: input, shape index: {}]
  %s2 = inlined_call_operand.hbm [shape: bf16[128,128], index: 2, kind: input, shape index: {}]
  %s3 = inlined_call_operand.vmem [shape: f32[1,128], index: 3, kind: input, shape index: {}]
  %s4 = inlined_call_operand.hbm [shape: bf16[8,8,128], index: 4, kind: output, shape index: {}]
  %s5 = sld [smem:[#allocation0]]
  $region34: #{tpu_custom_call.1} parent=0
    _
  %s7 = ssub.s32 1, %s5
  %s8 = scalar_select 0, %s7, %s5
  $region1: #{tpu_custom_call.1} parent=0
    #allocation4 [shape = 'u8[32768]{0}', space=vmem, size = 0x8000, scoped, tag = 'input window, operand 2, single buffered']
    #allocation5 [shape = 's32[1]{0}', space=sflag, size = 0x4, scoped, tag = 'scoped memory for tpu_custom_call.1']
    #allocation6 [shape = 's32[1]{0}', space=sflag, size = 0x4, scoped, tag = 'scoped memory for tpu_custom_call.1']
    #allocation7 [shape = 'u8[16384]{0}', space=vmem, size = 0x4000, scoped, tag = 'output window, operand 0, single buffered']
    %9 = vsyncpa [#allocation5], 0
    %10 = vsyncpa [#allocation6], 0
    // Predicated region
    $region2: #{tpu_custom_call.1} parent=1 // pred_check
      _
    $region3: #{tpu_custom_call.1} parent=1 // pred_check_branch
      %12 = sbr.rel (0) target = $region5
    $region4: #{tpu_custom_call.1} parent=1 // pred_region
      _
    $region5: #{tpu_custom_call.1} parent=1 // pred_fallthru
      _
    // Predicated region
    $region6: #{tpu_custom_call.1} parent=1 // pred_check
      _
    $region7: #{tpu_custom_call.1} parent=1 // pred_check_branch
      %14 = sbr.rel (0) target = $region9
    $region8: #{tpu_custom_call.1} parent=1 // pred_region
      _
    $region9: #{tpu_custom_call.1} parent=1 // pred_fallthru
      _
    // Predicated region
    $region10: #{tpu_custom_call.1} parent=1 // pred_check
      _
    $region11: #{tpu_custom_call.1} parent=1 // pred_check_branch
      %16 = sbr.rel (0) target = $region13
    $region12: #{tpu_custom_call.1} parent=1 // pred_region
      %s18 = ssub.s32 1024, 1024
      %19 = vsyncadd [#allocation5], %s18
      %s20 = sshll.u32 [#allocation4], 4
      %s21 = int_to_ptr.vmem [resolvable:$true] %s20
      %26 = dma.hbm_to_vmem [thread:$0]  %s2, 1024, %s21, [#allocation5], 64, 64, 4
    $region13: #{tpu_custom_call.1} parent=1 // pred_fallthru
      _
    // Predicated region
    $region14: #{tpu_custom_call.1} parent=1 // pred_check
      _
    $region15: #{tpu_custom_call.1} parent=1 // pred_check_branch
      %28 = sbr.rel (0) target = $region17
    $region16: #{tpu_custom_call.1} parent=1 // pred_region
      _
    $region17: #{tpu_custom_call.1} parent=1 // pred_fallthru
      _
    // Predicated region
    $region18: #{tpu_custom_call.1} parent=1 // pred_check
      _
    $region19: #{tpu_custom_call.1} parent=1 // pred_check_branch
      %30 = sbr.rel (0) target = $region21
    $region20: #{tpu_custom_call.1} parent=1 // pred_region
      %31 = dma.done [#allocation5], 1024
    $region21: #{tpu_custom_call.1} parent=1 // pred_fallthru
      _
    %p33 = scmp.eq.s32.totalorder 0, 0
    // Predicated region
    $region22: #{tpu_custom_call.1} parent=1 // pred_check
      %p34 = pneg %p33
    $region23: #{tpu_custom_call.1} parent=1 // pred_check_branch
      %36 = sbr.rel (%p34) target = $region25
    $region24: #{tpu_custom_call.1} parent=1 // pred_region
      %37 = vst [vmem:[#allocation2] sm:$0xff] 0.0
    $region25: #{tpu_custom_call.1} parent=1 // pred_fallthru
      _
    %v38 = vld [vmem:[%s0] sm:$0xf]
    %v39 = vld [vmem:[%s0 + $0x4] sm:$0xf]
    %v40 = vld [vmem:[%s0 + $0x8] sm:$0xf]
    %v41 = vld [vmem:[%s0 + $0xc] sm:$0xf]
    %v42 = vld [vmem:[%s0 + $0x10] sm:$0xf]
    %v43 = vld [vmem:[%s0 + $0x14] sm:$0xf]
    %v44 = vld [vmem:[%s0 + $0x18] sm:$0xf]
    %v45 = vld [vmem:[%s0 + $0x1c] sm:$0xf]
    %v46 = vunpack.c.l.bf16 %v38
    %v47 = vunpack.c.l.bf16 %v39
    %v48 = vunpack.c.l.bf16 %v40
    %v49 = vunpack.c.l.bf16 %v41
    %v50 = vunpack.c.l.bf16 %v42
    %v51 = vunpack.c.l.bf16 %v43
    %v52 = vunpack.c.l.bf16 %v44
    %v53 = vunpack.c.l.bf16 %v45
    %v54 = vpack.c.bf16 %v47, %v46
    %v55 = vpack.c.bf16 %v49, %v48
    %v56 = vpack.c.bf16 %v51, %v50
    %v57 = vpack.c.bf16 %v53, %v52
    %v58 = vld [vmem:[%s1] sm:$0x3]
    %v59 = vld [vmem:[%s3] sm:$0x1]
    %v61 = vlaneseq
    %v62 = vshrl.u32 %v61, 7
    %v63 = vsub.s32 0, %v62
    %v64 = vrot.slane %v59, %v63
    %vm66 = vcmask 31744
    %v68 = vsel %vm66, %v54, 0
    %v71 = vsel %vm66, %v55, 0
    %v74 = vsel %vm66, %v56, 0
    %v77 = vsel %vm66, %v57, 0
    %vm79 = vcmask 1041408
    %v81 = vsel %vm79, %v58, 0
    %83 = vmatprep.subr.bf16.mxu0 0
    %84 = vmatpush1.bf16.msra.mxu0 %v81
    %85 = vmatprep.subr.bf16.mxu0 0
    %86 = vmatpush1.bf16.msra.mxu0 0
    %87 = vmatprep.subr.bf16.mxu0 0
    %88 = vmatpush1.bf16.msra.mxu0 0
    %89 = vmatprep.subr.bf16.mxu0 0
    %90 = vmatpush1.bf16.msra.mxu0 0
    %91 = vmatprep.subr.bf16.mxu0 0
    %92 = vmatpush1.bf16.msra.mxu0 0
    %93 = vmatprep.subr.bf16.mxu0 0
    %94 = vmatpush1.bf16.msra.mxu0 0
    %95 = vmatprep.subr.bf16.mxu0 0
    %96 = vmatpush1.bf16.msra.mxu0 0
    %97 = vmatprep.subr.bf16.mxu0 0
    %98 = vmatpush1.bf16.msra.mxu0 0
    %99 = vmatprep.subr.bf16.mxu0 0
    %100 = vmatpush1.bf16.msra.mxu0 0
    %101 = vmatprep.subr.bf16.mxu0 0
    %102 = vmatpush1.bf16.msra.mxu0 0
    %103 = vmatprep.subr.bf16.mxu0 0
    %104 = vmatpush1.bf16.msra.mxu0 0
    %105 = vmatprep.subr.bf16.mxu0 0
    %106 = vmatpush1.bf16.msra.mxu0 0
    %107 = vmatprep.subr.bf16.mxu0 0
    %108 = vmatpush1.bf16.msra.mxu0 0
    %109 = vmatprep.subr.bf16.mxu0 0
    %110 = vmatpush1.bf16.msra.mxu0 0
    %111 = vmatprep.subr.bf16.mxu0 0
    %112 = vmatpush1.bf16.msra.mxu0 0
    %113 = vmatprep.subr.bf16.mxu0 0
    %114 = vmatpush1.bf16.msra.mxu0 0
    %115 = vmatprep.mubr.bf16.mxu0 0
    %116 = vmatmul.mubr.bf16.gmra.mrb[0].mxu0 %v68
    %v117 = vpop.f32.mrb[0].mxu0
    %v118 = vadd.f32 %v64, %v117
    %v119 = vpop.f32.mrb[0].mxu0
    %v120 = vpop.f32.mrb[0].mxu0
    %v121 = vadd.f32 %v64, %v120
    %v122 = vpop.f32.mrb[0].mxu0
    %123 = vmatprep.mubr.bf16.mxu0 0
    %124 = vmatmul.mubr.bf16.gmra.mrb[0].mxu0 %v71
    %v125 = vpop.f32.mrb[0].mxu0
    %v126 = vadd.f32 %v64, %v125
    %v127 = vpop.f32.mrb[0].mxu0
    %v128 = vpop.f32.mrb[0].mxu0
    %v129 = vadd.f32 %v64, %v128
    %v130 = vpop.f32.mrb[0].mxu0
    %131 = vmatprep.mubr.bf16.mxu0 0
    %132 = vmatmul.mubr.bf16.gmra.mrb[0].mxu0 %v74
    %v133 = vpop.f32.mrb[0].mxu0
    %v134 = vadd.f32 %v64, %v133
    %v135 = vpop.f32.mrb[0].mxu0
    %v136 = vpop.f32.mrb[0].mxu0
    %v137 = vadd.f32 %v64, %v136
    %v138 = vpop.f32.mrb[0].mxu0
    %139 = vmatprep.mubr.bf16.mxu0 0
    %140 = vmatmul.mubr.bf16.gmra.mrb[0].mxu0 %v77
    %v141 = vpop.f32.mrb[0].mxu0
    %v142 = vadd.f32 %v64, %v141
    %v143 = vpop.f32.mrb[0].mxu0
    %v144 = vpop.f32.mrb[0].mxu0
    %v145 = vadd.f32 %v64, %v144
    %v146 = vpop.f32.mrb[0].mxu0
    %147 = vdwg.mxu0
    %148 = vst [vmem:[#allocation3] sm:$0xff] %v118
    %149 = vst [vmem:[#allocation3 + $0x8] sm:$0xff] %v121
    %150 = vst [vmem:[#allocation3 + $0x10] sm:$0xff] %v126
    %151 = vst [vmem:[#allocation3 + $0x18] sm:$0xff] %v129
    %152 = vst [vmem:[#allocation3 + $0x20] sm:$0xff] %v134
    %153 = vst [vmem:[#allocation3 + $0x28] sm:$0xff] %v137
    %154 = vst [vmem:[#allocation3 + $0x30] sm:$0xff] %v142
    %155 = vst [vmem:[#allocation3 + $0x38] sm:$0xff] %v145
    %v156 = vld [vmem:[#allocation4] sm:$0xf]
    %v157 = vld [vmem:[#allocation4 + $0x4] sm:$0xf]
    %v158 = vld [vmem:[#allocation4 + $0x8] sm:$0xf]
    %v159 = vld [vmem:[#allocation4 + $0xc] sm:$0xf]
    %v160 = vld [vmem:[#allocation4 + $0x10] sm:$0xf]
    %v161 = vld [vmem:[#allocation4 + $0x14] sm:$0xf]
    %v162 = vld [vmem:[#allocation4 + $0x18] sm:$0xf]
    %v163 = vld [vmem:[#allocation4 + $0x1c] sm:$0xf]
    %v164 = vld [vmem:[#allocation4 + $0x20] sm:$0xf]
    %v165 = vld [vmem:[#allocation4 + $0x24] sm:$0xf]
    %v166 = vld [vmem:[#allocation4 + $0x28] sm:$0xf]
    %v167 = vld [vmem:[#allocation4 + $0x2c] sm:$0xf]
    %v168 = vld [vmem:[#allocation4 + $0x30] sm:$0xf]
    %v169 = vld [vmem:[#allocation4 + $0x34] sm:$0xf]
    %v170 = vld [vmem:[#allocation4 + $0x38] sm:$0xf]
    %v171 = vld [vmem:[#allocation4 + $0x3c] sm:$0xf]
    %v172 = vld [vmem:[#allocation2] sm:$0xff]
    %v173 = vld [vmem:[#allocation3] sm:$0xff]
    %v174 = vpack.c.bf16 %v172, %v172
    %v191 = vunpack.c.l.b16 %v156
    %v192 = vunpack.c.l.b16 %v157
    %v193 = vunpack.c.l.b16 %v158
    %v194 = vunpack.c.l.b16 %v159
    %v195 = vunpack.c.l.b16 %v160
    %v196 = vunpack.c.l.b16 %v161
    %v197 = vunpack.c.l.b16 %v162
    %v198 = vunpack.c.l.b16 %v163
    %v199 = vunpack.c.l.b16 %v164
    %v200 = vunpack.c.l.b16 %v165
    %v201 = vunpack.c.l.b16 %v166
    %v202 = vunpack.c.l.b16 %v167
    %v203 = vunpack.c.l.b16 %v168
    %v204 = vunpack.c.l.b16 %v169
    %v205 = vunpack.c.l.b16 %v170
    %v206 = vunpack.c.l.b16 %v171
    %v207 = vpack.c.b16 %v192, %v191
    %v208 = vpack.c.b16 %v194, %v193
    %v209 = vpack.c.b16 %v196, %v195
    %v210 = vpack.c.b16 %v198, %v197
    %v211 = vpack.c.b16 %v200, %v199
    %v212 = vpack.c.b16 %v202, %v201
    %v213 = vpack.c.b16 %v204, %v203
    %v214 = vpack.c.b16 %v206, %v205
    %223 = vmatprep.subr.bf16.mxu0 0
    %224 = vmatpush1.bf16.msra.mxu0 %v207
    %225 = vmatprep.subr.bf16.mxu0 0
    %226 = vmatpush1.bf16.msra.mxu0 %v208
    %227 = vmatprep.subr.bf16.mxu0 0
    %228 = vmatpush1.bf16.msra.mxu0 %v209
    %229 = vmatprep.subr.bf16.mxu0 0
    %230 = vmatpush1.bf16.msra.mxu0 %v210
    %231 = vmatprep.subr.bf16.mxu0 0
    %232 = vmatpush1.bf16.msra.mxu0 %v211
    %233 = vmatprep.subr.bf16.mxu0 0
    %234 = vmatpush1.bf16.msra.mxu0 %v212
    %235 = vmatprep.subr.bf16.mxu0 0
    %236 = vmatpush1.bf16.msra.mxu0 %v213
    %237 = vmatprep.subr.bf16.mxu0 0
    %238 = vmatpush1.bf16.msra.mxu0 %v214
    %239 = vmatprep.subr.bf16.mxu0 0
    %240 = vmatpush1.bf16.msra.mxu0 0
    %241 = vmatprep.subr.bf16.mxu0 0
    %242 = vmatpush1.bf16.msra.mxu0 0
    %243 = vmatprep.subr.bf16.mxu0 0
    %244 = vmatpush1.bf16.msra.mxu0 0
    %245 = vmatprep.subr.bf16.mxu0 0
    %246 = vmatpush1.bf16.msra.mxu0 0
    %247 = vmatprep.subr.bf16.mxu0 0
    %248 = vmatpush1.bf16.msra.mxu0 0
    %249 = vmatprep.subr.bf16.mxu0 0
    %250 = vmatpush1.bf16.msra.mxu0 0
    %251 = vmatprep.subr.bf16.mxu0 0
    %252 = vmatpush1.bf16.msra.mxu0 0
    %253 = vmatprep.subr.bf16.mxu0 0
    %254 = vmatpush1.bf16.msra.mxu0 0
    %255 = vmatprep.mubr.bf16.mxu0 0
    %256 = vmatmul.mubr.bf16.gmra.mrb[0].mxu0 %v174
    %v257 = vpop.f32.mrb[0].mxu0
    %v258 = vadd.f32 0.0, %v257
    %v259 = vpop.f32.mrb[0].mxu0
    %v260 = vpop.f32.mrb[0].mxu0
    %v261 = vpop.f32.mrb[0].mxu0
    %262 = vdwg.mxu0
    %v263 = vadd.f32 %v173, %v258
    %v264 = vtanh.pop %v263
    %v265 = vpack.c.bf16 %v264, %v264
    %266 = vst [vmem:[#allocation7] sm:$0xf] %v265
    %s267 = scalar_lea.vmem [#allocation3], 8
    %v268 = vld [vmem:[%s267] sm:$0xff]
    %269 = vmatprep.subr.bf16.mxu0 0
    %270 = vmatpush1.bf16.msra.mxu0 %v207
    %271 = vmatprep.subr.bf16.mxu0 0
    %272 = vmatpush1.bf16.msra.mxu0 %v208
    %273 = vmatprep.subr.bf16.mxu0 0
    %274 = vmatpush1.bf16.msra.mxu0 %v209
    %275 = vmatprep.subr.bf16.mxu0 0
    %276 = vmatpush1.bf16.msra.mxu0 %v210
    %277 = vmatprep.subr.bf16.mxu0 0
    %278 = vmatpush1.bf16.msra.mxu0 %v211
    %279 = vmatprep.subr.bf16.mxu0 0
    %280 = vmatpush1.bf16.msra.mxu0 %v212
    %281 = vmatprep.subr.bf16.mxu0 0
    %282 = vmatpush1.bf16.msra.mxu0 %v213
    %283 = vmatprep.subr.bf16.mxu0 0
    %284 = vmatpush1.bf16.msra.mxu0 %v214
    %285 = vmatprep.subr.bf16.mxu0 0
    %286 = vmatpush1.bf16.msra.mxu0 0
    %287 = vmatprep.subr.bf16.mxu0 0
    %288 = vmatpush1.bf16.msra.mxu0 0
    %289 = vmatprep.subr.bf16.mxu0 0
    %290 = vmatpush1.bf16.msra.mxu0 0
    %291 = vmatprep.subr.bf16.mxu0 0
    %292 = vmatpush1.bf16.msra.mxu0 0
    %293 = vmatprep.subr.bf16.mxu0 0
    %294 = vmatpush1.bf16.msra.mxu0 0
    %295 = vmatprep.subr.bf16.mxu0 0
    %296 = vmatpush1.bf16.msra.mxu0 0
    %297 = vmatprep.subr.bf16.mxu0 0
    %298 = vmatpush1.bf16.msra.mxu0 0
    %299 = vmatprep.subr.bf16.mxu0 0
    %300 = vmatpush1.bf16.msra.mxu0 0
    %301 = vmatprep.mubr.bf16.mxu0 0
    %302 = vmatmul.mubr.bf16.gmra.mrb[0].mxu0 %v265
    %v303 = vpop.f32.mrb[0].mxu0
    %v304 = vadd.f32 0.0, %v303
    %v305 = vpop.f32.mrb[0].mxu0
    %v306 = vpop.f32.mrb[0].mxu0
    %v307 = vpop.f32.mrb[0].mxu0
    %308 = vdwg.mxu0
    %v309 = vadd.f32 %v268, %v304
    %v310 = vtanh.pop %v309
    %v311 = vpack.c.bf16 %v310, %v310
    %s312 = scalar_lea.vmem [#allocation7], 4
    %313 = vst [vmem:[%s312] sm:$0xf] %v311
    %s314 = scalar_lea.vmem [#allocation3], 16
    %v315 = vld [vmem:[%s314] sm:$0xff]
    %316 = vmatprep.subr.bf16.mxu0 0
    %317 = vmatpush1.bf16.msra.mxu0 %v207
    %318 = vmatprep.subr.bf16.mxu0 0
    %319 = vmatpush1.bf16.msra.mxu0 %v208
    %320 = vmatprep.subr.bf16.mxu0 0
    %321 = vmatpush1.bf16.msra.mxu0 %v209
    %322 = vmatprep.subr.bf16.mxu0 0
    %323 = vmatpush1.bf16.msra.mxu0 %v210
    %324 = vmatprep.subr.bf16.mxu0 0
    %325 = vmatpush1.bf16.msra.mxu0 %v211
    %326 = vmatprep.subr.bf16.mxu0 0
    %327 = vmatpush1.bf16.msra.mxu0 %v212
    %328 = vmatprep.subr.bf16.mxu0 0
    %329 = vmatpush1.bf16.msra.mxu0 %v213
    %330 = vmatprep.subr.bf16.mxu0 0
    %331 = vmatpush1.bf16.msra.mxu0 %v214
    %332 = vmatprep.subr.bf16.mxu0 0
    %333 = vmatpush1.bf16.msra.mxu0 0
    %334 = vmatprep.subr.bf16.mxu0 0
    %335 = vmatpush1.bf16.msra.mxu0 0
    %336 = vmatprep.subr.bf16.mxu0 0
    %337 = vmatpush1.bf16.msra.mxu0 0
    %338 = vmatprep.subr.bf16.mxu0 0
    %339 = vmatpush1.bf16.msra.mxu0 0
    %340 = vmatprep.subr.bf16.mxu0 0
    %341 = vmatpush1.bf16.msra.mxu0 0
    %342 = vmatprep.subr.bf16.mxu0 0
    %343 = vmatpush1.bf16.msra.mxu0 0
    %344 = vmatprep.subr.bf16.mxu0 0
    %345 = vmatpush1.bf16.msra.mxu0 0
    %346 = vmatprep.subr.bf16.mxu0 0
    %347 = vmatpush1.bf16.msra.mxu0 0
    %348 = vmatprep.mubr.bf16.mxu0 0
    %349 = vmatmul.mubr.bf16.gmra.mrb[0].mxu0 %v311
    %v350 = vpop.f32.mrb[0].mxu0
    %v351 = vadd.f32 0.0, %v350
    %v352 = vpop.f32.mrb[0].mxu0
    %v353 = vpop.f32.mrb[0].mxu0
    %v354 = vpop.f32.mrb[0].mxu0
    %355 = vdwg.mxu0
    %v356 = vadd.f32 %v315, %v351
    %v357 = vtanh.pop %v356
    %v358 = vpack.c.bf16 %v357, %v357
    %s359 = scalar_lea.vmem [#allocation7], 8
    %360 = vst [vmem:[%s359] sm:$0xf] %v358
    %s361 = scalar_lea.vmem [#allocation3], 24
    %v362 = vld [vmem:[%s361] sm:$0xff]
    %363 = vmatprep.subr.bf16.mxu0 0
    %364 = vmatpush1.bf16.msra.mxu0 %v207
    %365 = vmatprep.subr.bf16.mxu0 0
    %366 = vmatpush1.bf16.msra.mxu0 %v208
    %367 = vmatprep.subr.bf16.mxu0 0
    %368 = vmatpush1.bf16.msra.mxu0 %v209
    %369 = vmatprep.subr.bf16.mxu0 0
    %370 = vmatpush1.bf16.msra.mxu0 %v210
    %371 = vmatprep.subr.bf16.mxu0 0
    %372 = vmatpush1.bf16.msra.mxu0 %v211
    %373 = vmatprep.subr.bf16.mxu0 0
    %374 = vmatpush1.bf16.msra.mxu0 %v212
    %375 = vmatprep.subr.bf16.mxu0 0
    %376 = vmatpush1.bf16.msra.mxu0 %v213
    %377 = vmatprep.subr.bf16.mxu0 0
    %378 = vmatpush1.bf16.msra.mxu0 %v214
    %379 = vmatprep.subr.bf16.mxu0 0
    %380 = vmatpush1.bf16.msra.mxu0 0
    %381 = vmatprep.subr.bf16.mxu0 0
    %382 = vmatpush1.bf16.msra.mxu0 0
    %383 = vmatprep.subr.bf16.mxu0 0
    %384 = vmatpush1.bf16.msra.mxu0 0
    %385 = vmatprep.subr.bf16.mxu0 0
    %386 = vmatpush1.bf16.msra.mxu0 0
    %387 = vmatprep.subr.bf16.mxu0 0
    %388 = vmatpush1.bf16.msra.mxu0 0
    %389 = vmatprep.subr.bf16.mxu0 0
    %390 = vmatpush1.bf16.msra.mxu0 0
    %391 = vmatprep.subr.bf16.mxu0 0
    %392 = vmatpush1.bf16.msra.mxu0 0
    %393 = vmatprep.subr.bf16.mxu0 0
    %394 = vmatpush1.bf16.msra.mxu0 0
    %395 = vmatprep.mubr.bf16.mxu0 0
    %396 = vmatmul.mubr.bf16.gmra.mrb[0].mxu0 %v358
    %v397 = vpop.f32.mrb[0].mxu0
    %v398 = vadd.f32 0.0, %v397
    %v399 = vpop.f32.mrb[0].mxu0
    %v400 = vpop.f32.mrb[0].mxu0
    %v401 = vpop.f32.mrb[0].mxu0
    %402 = vdwg.mxu0
    %v403 = vadd.f32 %v362, %v398
    %v404 = vtanh.pop %v403
    %v405 = vpack.c.bf16 %v404, %v404
    %s406 = scalar_lea.vmem [#allocation7], 12
    %407 = vst [vmem:[%s406] sm:$0xf] %v405
    %s408 = scalar_lea.vmem [#allocation3], 32
    %v409 = vld [vmem:[%s408] sm:$0xff]
    %410 = vmatprep.subr.bf16.mxu0 0
    %411 = vmatpush1.bf16.msra.mxu0 %v207
    %412 = vmatprep.subr.bf16.mxu0 0
    %413 = vmatpush1.bf16.msra.mxu0 %v208
    %414 = vmatprep.subr.bf16.mxu0 0
    %415 = vmatpush1.bf16.msra.mxu0 %v209
    %416 = vmatprep.subr.bf16.mxu0 0
    %417 = vmatpush1.bf16.msra.mxu0 %v210
    %418 = vmatprep.subr.bf16.mxu0 0
    %419 = vmatpush1.bf16.msra.mxu0 %v211
    %420 = vmatprep.subr.bf16.mxu0 0
    %421 = vmatpush1.bf16.msra.mxu0 %v212
    %422 = vmatprep.subr.bf16.mxu0 0
    %423 = vmatpush1.bf16.msra.mxu0 %v213
    %424 = vmatprep.subr.bf16.mxu0 0
    %425 = vmatpush1.bf16.msra.mxu0 %v214
    %426 = vmatprep.subr.bf16.mxu0 0
    %427 = vmatpush1.bf16.msra.mxu0 0
    %428 = vmatprep.subr.bf16.mxu0 0
    %429 = vmatpush1.bf16.msra.mxu0 0
    %430 = vmatprep.subr.bf16.mxu0 0
    %431 = vmatpush1.bf16.msra.mxu0 0
    %432 = vmatprep.subr.bf16.mxu0 0
    %433 = vmatpush1.bf16.msra.mxu0 0
    %434 = vmatprep.subr.bf16.mxu0 0
    %435 = vmatpush1.bf16.msra.mxu0 0
    %436 = vmatprep.subr.bf16.mxu0 0
    %437 = vmatpush1.bf16.msra.mxu0 0
    %438 = vmatprep.subr.bf16.mxu0 0
    %439 = vmatpush1.bf16.msra.mxu0 0
    %440 = vmatprep.subr.bf16.mxu0 0
    %441 = vmatpush1.bf16.msra.mxu0 0
    %442 = vmatprep.mubr.bf16.mxu0 0
    %443 = vmatmul.mubr.bf16.gmra.mrb[0].mxu0 %v405
    %v444 = vpop.f32.mrb[0].mxu0
    %v445 = vadd.f32 0.0, %v444
    %v446 = vpop.f32.mrb[0].mxu0
    %v447 = vpop.f32.mrb[0].mxu0
    %v448 = vpop.f32.mrb[0].mxu0
    %449 = vdwg.mxu0
    %v450 = vadd.f32 %v409, %v445
    %v451 = vtanh.pop %v450
    %v452 = vpack.c.bf16 %v451, %v451
    %s453 = scalar_lea.vmem [#allocation7], 16
    %454 = vst [vmem:[%s453] sm:$0xf] %v452
    %s455 = scalar_lea.vmem [#allocation3], 40
    %v456 = vld [vmem:[%s455] sm:$0xff]
    %457 = vmatprep.subr.bf16.mxu0 0
    %458 = vmatpush1.bf16.msra.mxu0 %v207
    %459 = vmatprep.subr.bf16.mxu0 0
    %460 = vmatpush1.bf16.msra.mxu0 %v208
    %461 = vmatprep.subr.bf16.mxu0 0
    %462 = vmatpush1.bf16.msra.mxu0 %v209
    %463 = vmatprep.subr.bf16.mxu0 0
    %464 = vmatpush1.bf16.msra.mxu0 %v210
    %465 = vmatprep.subr.bf16.mxu0 0
    %466 = vmatpush1.bf16.msra.mxu0 %v211
    %467 = vmatprep.subr.bf16.mxu0 0
    %468 = vmatpush1.bf16.msra.mxu0 %v212
    %469 = vmatprep.subr.bf16.mxu0 0
    %470 = vmatpush1.bf16.msra.mxu0 %v213
    %471 = vmatprep.subr.bf16.mxu0 0
    %472 = vmatpush1.bf16.msra.mxu0 %v214
    %473 = vmatprep.subr.bf16.mxu0 0
    %474 = vmatpush1.bf16.msra.mxu0 0
    %475 = vmatprep.subr.bf16.mxu0 0
    %476 = vmatpush1.bf16.msra.mxu0 0
    %477 = vmatprep.subr.bf16.mxu0 0
    %478 = vmatpush1.bf16.msra.mxu0 0
    %479 = vmatprep.subr.bf16.mxu0 0
    %480 = vmatpush1.bf16.msra.mxu0 0
    %481 = vmatprep.subr.bf16.mxu0 0
    %482 = vmatpush1.bf16.msra.mxu0 0
    %483 = vmatprep.subr.bf16.mxu0 0
    %484 = vmatpush1.bf16.msra.mxu0 0
    %485 = vmatprep.subr.bf16.mxu0 0
    %486 = vmatpush1.bf16.msra.mxu0 0
    %487 = vmatprep.subr.bf16.mxu0 0
    %488 = vmatpush1.bf16.msra.mxu0 0
    %489 = vmatprep.mubr.bf16.mxu0 0
    %490 = vmatmul.mubr.bf16.gmra.mrb[0].mxu0 %v452
    %v491 = vpop.f32.mrb[0].mxu0
    %v492 = vadd.f32 0.0, %v491
    %v493 = vpop.f32.mrb[0].mxu0
    %v494 = vpop.f32.mrb[0].mxu0
    %v495 = vpop.f32.mrb[0].mxu0
    %496 = vdwg.mxu0
    %v497 = vadd.f32 %v456, %v492
    %v498 = vtanh.pop %v497
    %v499 = vpack.c.bf16 %v498, %v498
    %s500 = scalar_lea.vmem [#allocation7], 20
    %501 = vst [vmem:[%s500] sm:$0xf] %v499
    %s502 = scalar_lea.vmem [#allocation3], 48
    %v503 = vld [vmem:[%s502] sm:$0xff]
    %504 = vmatprep.subr.bf16.mxu0 0
    %505 = vmatpush1.bf16.msra.mxu0 %v207
    %506 = vmatprep.subr.bf16.mxu0 0
    %507 = vmatpush1.bf16.msra.mxu0 %v208
    %508 = vmatprep.subr.bf16.mxu0 0
    %509 = vmatpush1.bf16.msra.mxu0 %v209
    %510 = vmatprep.subr.bf16.mxu0 0
    %511 = vmatpush1.bf16.msra.mxu0 %v210
    %512 = vmatprep.subr.bf16.mxu0 0
    %513 = vmatpush1.bf16.msra.mxu0 %v211
    %514 = vmatprep.subr.bf16.mxu0 0
    %515 = vmatpush1.bf16.msra.mxu0 %v212
    %516 = vmatprep.subr.bf16.mxu0 0
    %517 = vmatpush1.bf16.msra.mxu0 %v213
    %518 = vmatprep.subr.bf16.mxu0 0
    %519 = vmatpush1.bf16.msra.mxu0 %v214
    %520 = vmatprep.subr.bf16.mxu0 0
    %521 = vmatpush1.bf16.msra.mxu0 0
    %522 = vmatprep.subr.bf16.mxu0 0
    %523 = vmatpush1.bf16.msra.mxu0 0
    %524 = vmatprep.subr.bf16.mxu0 0
    %525 = vmatpush1.bf16.msra.mxu0 0
    %526 = vmatprep.subr.bf16.mxu0 0
    %527 = vmatpush1.bf16.msra.mxu0 0
    %528 = vmatprep.subr.bf16.mxu0 0
    %529 = vmatpush1.bf16.msra.mxu0 0
    %530 = vmatprep.subr.bf16.mxu0 0
    %531 = vmatpush1.bf16.msra.mxu0 0
    %532 = vmatprep.subr.bf16.mxu0 0
    %533 = vmatpush1.bf16.msra.mxu0 0
    %534 = vmatprep.subr.bf16.mxu0 0
    %535 = vmatpush1.bf16.msra.mxu0 0
    %536 = vmatprep.mubr.bf16.mxu0 0
    %537 = vmatmul.mubr.bf16.gmra.mrb[0].mxu0 %v499
    %v538 = vpop.f32.mrb[0].mxu0
    %v539 = vadd.f32 0.0, %v538
    %v540 = vpop.f32.mrb[0].mxu0
    %v541 = vpop.f32.mrb[0].mxu0
    %v542 = vpop.f32.mrb[0].mxu0
    %543 = vdwg.mxu0
    %v544 = vadd.f32 %v503, %v539
    %v545 = vtanh.pop %v544
    %v546 = vpack.c.bf16 %v545, %v545
    %s547 = scalar_lea.vmem [#allocation7], 24
    %548 = vst [vmem:[%s547] sm:$0xf] %v546
    %s549 = scalar_lea.vmem [#allocation3], 56
    %v550 = vld [vmem:[%s549] sm:$0xff]
    %551 = vmatprep.subr.bf16.mxu0 0
    %552 = vmatpush1.bf16.msra.mxu0 %v207
    %553 = vmatprep.subr.bf16.mxu0 0
    %554 = vmatpush1.bf16.msra.mxu0 %v208
    %555 = vmatprep.subr.bf16.mxu0 0
    %556 = vmatpush1.bf16.msra.mxu0 %v209
    %557 = vmatprep.subr.bf16.mxu0 0
    %558 = vmatpush1.bf16.msra.mxu0 %v210
    %559 = vmatprep.subr.bf16.mxu0 0
    %560 = vmatpush1.bf16.msra.mxu0 %v211
    %561 = vmatprep.subr.bf16.mxu0 0
    %562 = vmatpush1.bf16.msra.mxu0 %v212
    %563 = vmatprep.subr.bf16.mxu0 0
    %564 = vmatpush1.bf16.msra.mxu0 %v213
    %565 = vmatprep.subr.bf16.mxu0 0
    %566 = vmatpush1.bf16.msra.mxu0 %v214
    %567 = vmatprep.subr.bf16.mxu0 0
    %568 = vmatpush1.bf16.msra.mxu0 0
    %569 = vmatprep.subr.bf16.mxu0 0
    %570 = vmatpush1.bf16.msra.mxu0 0
    %571 = vmatprep.subr.bf16.mxu0 0
    %572 = vmatpush1.bf16.msra.mxu0 0
    %573 = vmatprep.subr.bf16.mxu0 0
    %574 = vmatpush1.bf16.msra.mxu0 0
    %575 = vmatprep.subr.bf16.mxu0 0
    %576 = vmatpush1.bf16.msra.mxu0 0
    %577 = vmatprep.subr.bf16.mxu0 0
    %578 = vmatpush1.bf16.msra.mxu0 0
    %579 = vmatprep.subr.bf16.mxu0 0
    %580 = vmatpush1.bf16.msra.mxu0 0
    %581 = vmatprep.subr.bf16.mxu0 0
    %582 = vmatpush1.bf16.msra.mxu0 0
    %583 = vmatprep.mubr.bf16.mxu0 0
    %584 = vmatmul.mubr.bf16.gmra.mrb[0].mxu0 %v546
    %v585 = vpop.f32.mrb[0].mxu0
    %v586 = vadd.f32 0.0, %v585
    %v587 = vpop.f32.mrb[0].mxu0
    %v588 = vpop.f32.mrb[0].mxu0
    %v589 = vpop.f32.mrb[0].mxu0
    %590 = vdwg.mxu0
    %v591 = vadd.f32 %v550, %v586
    %v592 = vtanh.pop %v591
    %v593 = vpack.c.bf16 %v592, %v592
    %s594 = scalar_lea.vmem [#allocation7], 28
    %595 = vst [vmem:[%s594] sm:$0xf] %v593
    %596 = vst [vmem:[#allocation2] sm:$0xff] %v592
    // Predicated region
    $region26: #{tpu_custom_call.1} parent=1 // pred_check
      _
    $region27: #{tpu_custom_call.1} parent=1 // pred_check_branch
      %598 = sbr.rel (0) target = $region29
    $region28: #{tpu_custom_call.1} parent=1 // pred_region
      %s600 = ssub.s32 512, 512
      %601 = vsyncadd [#allocation6], %s600
      %s602 = sshll.u32 [#allocation7], 4
      %s603 = int_to_ptr.vmem [resolvable:$true] %s602
      %608 = dma.vmem_to_hbm [thread:$0]  %s603, 512, %s4, [#allocation6], 64, 64, 4
    $region29: #{tpu_custom_call.1} parent=1 // pred_fallthru
      _
    // Predicated region
    $region30: #{tpu_custom_call.1} parent=1 // pred_check
      _
    $region31: #{tpu_custom_call.1} parent=1 // pred_check_branch
      %610 = sbr.rel (0) target = $region33
    $region32: #{tpu_custom_call.1} parent=1 // pred_region
      %611 = dma.done [#allocation6], 512
    $region33: #{tpu_custom_call.1} parent=1 // pred_fallthru
      _
    %612 = vsyncpa [#allocation5], 1
    %613 = vsyncpa [#allocation6], 1

</llo_original>
